<compile_context>
chip_gen: v5e
topology: v5e:2x2
jax: 0.10.0
libtpu: 0.0.40
codegen_flags: <defaults>
</compile_context>

<pallas_src>
import math
import functools

import jax
import jax.numpy as jnp
from jax.experimental import pallas as pl
from jax.experimental.pallas import tpu as pltpu


def _robust_conv_kernel(xp_ref, xn_ref, w_ref, b_ref, out_ref, *,
                        KH, KW, Wp, n_out, stride):
    """One image (both interval halves) per grid step.

    xp_ref, xn_ref : (1, Cin, L)            flattened, zero-padded p/n images
    w_ref          : (2*Cout, 2*KH*KW*Cin)  [[(W+|W|)/2, (W-|W|)/2],
                                             [(W-|W|)/2, (W+|W|)/2]]
    b_ref          : (Cout, 1)
    out_ref        : (2, 1, Cout, n_out)    n_out = Ho * Wp  (lane-dense)
    """
    xp = xp_ref[0].astype(jnp.float32)          # (Cin, L)
    xn = xn_ref[0].astype(jnp.float32)
    cout = b_ref.shape[0]

    def tap_windows(img):
        wins = []
        for kh in range(KH):
            for kw in range(KW):
                s = kh * Wp + kw                # flat offset of tap (kh, kw)
                if stride == 1:
                    wins.append(img[:, s:s + n_out])
                else:
                    # TODO(synk): lane-strided slice; pre-split the stride
                    # phases in the wrapper if the stride>1 path becomes hot.
                    wins.append(img[:, s:s + stride * (n_out - 1) + 1:stride])
        return wins

    # im2col operand (2*KH*KW*Cin, n_out): p-tap rows first, then n-tap rows.
    x_cols = jnp.concatenate(tap_windows(xp) + tap_windows(xn), axis=0)

    # Single MXU matmul: rows [:Cout] = upper bound, rows [Cout:] = lower.
    res = jnp.dot(w_ref[...], x_cols, preferred_element_type=jnp.float32)

    bias = b_ref[...].astype(jnp.float32)       # (Cout, 1) broadcasts on lanes
    out_ref[0, 0] = (res[:cout] + bias).astype(out_ref.dtype)
    out_ref[1, 0] = (res[cout:] + bias).astype(out_ref.dtype)


def robust_conv2d(x_nchw, weight_oihw, bias, *, stride=1, padding=0,
                  dilation=1, groups=1):
    """Robust (IBP) conv2d forward. x_nchw: (B, Cin, H, W), B even.
    weight_oihw: (Cout, Cin, KH, KW). Returns (B, Cout, Ho, Wo) NCHW."""
    B, Cin, H, W = x_nchw.shape
    Cout, Cin_w, KH, KW = weight_oihw.shape
    assert B % 2 == 0, "robust mode needs an even batch (p/n halves)"
    assert Cin_w == Cin
    assert dilation == 1 and groups == 1, "only dilation=1, groups=1 supported"
    assert bias is not None, "bias=None path not implemented"
    Bp = B // 2

    Hp, Wp = H + 2 * padding, W + 2 * padding
    Ho = (Hp - KH) // stride + 1
    Wo = (Wp - KW) // stride + 1
    n_out = Ho * Wp                     # flat accumulator width (full rows)
    ktot = KH * KW * Cin

    # Last flat element any tap window touches -> extra zero rows at bottom.
    s_max = (KH - 1) * Wp + (KW - 1)
    l_needed = stride * (n_out - 1) + s_max + 1
    extra_rows = max(0, -(-(l_needed - Hp * Wp) // Wp))
    L = (Hp + extra_rows) * Wp

    # Single fused pad (+ halo rows) + spatial flatten; input stays NCHW.
    x_pad = jnp.pad(x_nchw, ((0, 0), (0, 0),
                             (padding, padding + extra_rows),
                             (padding, padding)))
    x_flat = x_pad.reshape(B, Cin, L)

    # ---- one-time weight prep (wrapper side): fold |W| and the interval
    # center/radius arithmetic into im2col weights.
    w_flat = jnp.transpose(weight_oihw, (0, 2, 3, 1)).reshape(Cout, ktot)
    w_flat = w_flat.astype(jnp.float32)
    a_flat = jnp.abs(w_flat)
    w_p = (w_flat + a_flat) * 0.5       # = relu(W)
    w_n = (w_flat - a_flat) * 0.5       # = min(W, 0)
    w_big = jnp.concatenate(
        [jnp.concatenate([w_p, w_n], axis=1),
         jnp.concatenate([w_n, w_p], axis=1)], axis=0)   # (2*Cout, 2*ktot)
    b2d = bias.astype(jnp.float32).reshape(Cout, 1)

    kernel = functools.partial(_robust_conv_kernel, KH=KH, KW=KW, Wp=Wp,
                               n_out=n_out, stride=stride)

    out = pl.pallas_call(
        kernel,
        out_shape=jax.ShapeDtypeStruct((2, Bp, Cout, n_out), x_nchw.dtype),
        grid_spec=pltpu.PrefetchScalarGridSpec(
            num_scalar_prefetch=0,
            grid=(Bp,),
            in_specs=[
                pl.BlockSpec((1, Cin, L), lambda b: (b, 0, 0)),        # p half
                pl.BlockSpec((1, Cin, L), lambda b: (b + Bp, 0, 0)),   # n half
                pl.BlockSpec((2 * Cout, 2 * ktot), lambda b: (0, 0)),
                pl.BlockSpec((Cout, 1), lambda b: (0, 0)),
            ],
            out_specs=pl.BlockSpec((2, 1, Cout, n_out),
                                   lambda b: (0, b, 0, 0)),
        ),
        compiler_params=pltpu.CompilerParams(
            dimension_semantics=("parallel",)),
    )(x_flat, x_flat, w_big, b2d)

    # (2, Bp, Cout, Ho*Wp) -> (B, Cout, Ho, Wo): cheap reshape + column slice
    # (replaces the previous full concat + NHWC->NCHW transpose passes).
    out = out.reshape(2 * Bp, Cout, Ho, Wp)[:, :, :, :Wo]
    return out


def _reference(x_nchw, weight_oihw, bias, *, stride, padding):
    """Pure-JAX reference mirroring the PyTorch robust forward."""
    B = x_nchw.shape[0]
    p, n = x_nchw[:B // 2], x_nchw[B // 2:]
    u = (p + n) / 2.0
    r = (p - n) / 2.0
    dn = jax.lax.conv_dimension_numbers(
        u.shape, weight_oihw.shape, ("NCHW", "OIHW", "NCHW"))
    conv = lambda lhs, w: jax.lax.conv_general_dilated(
        lhs, w, window_strides=(stride, stride),
        padding=[(padding, padding), (padding, padding)],
        dimension_numbers=dn)
    out_u = conv(u, weight_oihw) + bias.reshape(1, -1, 1, 1)
    out_r = conv(r, jnp.abs(weight_oihw))
    return jnp.concatenate([out_u + out_r, out_u - out_r], axis=0)


if __name__ == "__main__":
    # module config: RobustConv2d(in_channels=4, out_channels=8, kernel_size=3,
    #                             stride=1, padding=1, bias=True)
    in_channels, out_channels, kernel_size = 4, 8, 3
    stride, padding = 1, 1
    B, H, W = 4, 16, 16   # B even: first half = upper, second half = lower

    key = jax.random.PRNGKey(0)
    kx, kw = jax.random.split(key)
    x = jax.random.normal(kx, (B, in_channels, H, W), dtype=jnp.float32)
    # weight ~ randn * 1/sqrt(k*k*Cin/groups), bias = zeros  (as in __init__)
    scale = 1.0 / math.sqrt(kernel_size * kernel_size * in_channels)
    weight = jax.random.normal(
        kw, (out_channels, in_channels, kernel_size, kernel_size),
        dtype=jnp.float32) * scale
    bias = jnp.zeros((out_channels,), dtype=jnp.float32)

    out = robust_conv2d(x, weight, bias, stride=stride, padding=padding)
    out = jax.block_until_ready(out)

    ref = _reference(x, weight, bias, stride=stride, padding=padding)
    assert out.shape == ref.shape == (B, out_channels, H, W)
    assert jnp.allclose(out, ref, atol=1e-4, rtol=1e-4), (
        float(jnp.max(jnp.abs(out - ref))))

    print("KERNEL_OK")
</pallas_src>

<mosaic_0001>
module attributes {stable_mosaic.version = 11 : i64} {
  func.func @_robust_conv_kernel(%arg0: i32, %arg1: memref<1x4x342xf32, #tpu.memory_space<vmem>>, %arg2: memref<1x4x342xf32, #tpu.memory_space<vmem>>, %arg3: memref<16x72xf32, #tpu.memory_space<vmem>>, %arg4: memref<8x1xf32, #tpu.memory_space<vmem>>, %arg5: memref<2x1x8x288xf32, #tpu.memory_space<vmem>>) attributes {dimension_semantics = [#tpu.dimension_semantics<parallel>], iteration_bounds = array<i64: 2>, scalar_prefetch = 0 : i64, scratch_operands = 0 : i64, tpu.core_type = #tpu.core_type<tc>, window_params = [{transform_indices = @transform_0, window_bounds = array<i64: 1, 4, 342>}, {transform_indices = @transform_1, window_bounds = array<i64: 1, 4, 342>}, {pipeline_mode = #tpu.pipeline_mode<synchronous>, transform_indices = @transform_2, window_bounds = array<i64: 16, 72>}, {pipeline_mode = #tpu.pipeline_mode<synchronous>, transform_indices = @transform_3, window_bounds = array<i64: 8, 1>}, {transform_indices = @transform_4, window_bounds = array<i64: 2, 1, 8, 288>}]} {
    %c0 = arith.constant 0 : index
    %c0_0 = arith.constant 0 : index
    %c0_1 = arith.constant 0 : index
    %0 = vector.load %arg1[%c0, %c0_0, %c0_1] : memref<1x4x342xf32, #tpu.memory_space<vmem>>, vector<1x4x342xf32>
    %1 = vector.shape_cast %0 : vector<1x4x342xf32> to vector<4x342xf32>
    %c0_2 = arith.constant 0 : index
    %c0_3 = arith.constant 0 : index
    %c0_4 = arith.constant 0 : index
    %2 = vector.load %arg2[%c0_2, %c0_3, %c0_4] : memref<1x4x342xf32, #tpu.memory_space<vmem>>, vector<1x4x342xf32>
    %3 = vector.shape_cast %2 : vector<1x4x342xf32> to vector<4x342xf32>
    %4 = vector.extract_strided_slice %1 {offsets = [0, 0], sizes = [4, 288], strides = [1, 1]} : vector<4x342xf32> to vector<4x288xf32>
    %5 = vector.extract_strided_slice %1 {offsets = [0, 1], sizes = [4, 288], strides = [1, 1]} : vector<4x342xf32> to vector<4x288xf32>
    %6 = vector.extract_strided_slice %1 {offsets = [0, 2], sizes = [4, 288], strides = [1, 1]} : vector<4x342xf32> to vector<4x288xf32>
    %7 = vector.extract_strided_slice %1 {offsets = [0, 18], sizes = [4, 288], strides = [1, 1]} : vector<4x342xf32> to vector<4x288xf32>
    %8 = vector.extract_strided_slice %1 {offsets = [0, 19], sizes = [4, 288], strides = [1, 1]} : vector<4x342xf32> to vector<4x288xf32>
    %9 = vector.extract_strided_slice %1 {offsets = [0, 20], sizes = [4, 288], strides = [1, 1]} : vector<4x342xf32> to vector<4x288xf32>
    %10 = vector.extract_strided_slice %1 {offsets = [0, 36], sizes = [4, 288], strides = [1, 1]} : vector<4x342xf32> to vector<4x288xf32>
    %11 = vector.extract_strided_slice %1 {offsets = [0, 37], sizes = [4, 288], strides = [1, 1]} : vector<4x342xf32> to vector<4x288xf32>
    %12 = vector.extract_strided_slice %1 {offsets = [0, 38], sizes = [4, 288], strides = [1, 1]} : vector<4x342xf32> to vector<4x288xf32>
    %13 = vector.extract_strided_slice %3 {offsets = [0, 0], sizes = [4, 288], strides = [1, 1]} : vector<4x342xf32> to vector<4x288xf32>
    %14 = vector.extract_strided_slice %3 {offsets = [0, 1], sizes = [4, 288], strides = [1, 1]} : vector<4x342xf32> to vector<4x288xf32>
    %15 = vector.extract_strided_slice %3 {offsets = [0, 2], sizes = [4, 288], strides = [1, 1]} : vector<4x342xf32> to vector<4x288xf32>
    %16 = vector.extract_strided_slice %3 {offsets = [0, 18], sizes = [4, 288], strides = [1, 1]} : vector<4x342xf32> to vector<4x288xf32>
    %17 = vector.extract_strided_slice %3 {offsets = [0, 19], sizes = [4, 288], strides = [1, 1]} : vector<4x342xf32> to vector<4x288xf32>
    %18 = vector.extract_strided_slice %3 {offsets = [0, 20], sizes = [4, 288], strides = [1, 1]} : vector<4x342xf32> to vector<4x288xf32>
    %19 = vector.extract_strided_slice %3 {offsets = [0, 36], sizes = [4, 288], strides = [1, 1]} : vector<4x342xf32> to vector<4x288xf32>
    %20 = vector.extract_strided_slice %3 {offsets = [0, 37], sizes = [4, 288], strides = [1, 1]} : vector<4x342xf32> to vector<4x288xf32>
    %21 = vector.extract_strided_slice %3 {offsets = [0, 38], sizes = [4, 288], strides = [1, 1]} : vector<4x342xf32> to vector<4x288xf32>
    %22 = tpu.concatenate %4, %5, %6, %7, %8, %9, %10, %11, %12, %13, %14, %15, %16, %17, %18, %19 in 0 : vector<4x288xf32>, vector<4x288xf32>, vector<4x288xf32>, vector<4x288xf32>, vector<4x288xf32>, vector<4x288xf32>, vector<4x288xf32>, vector<4x288xf32>, vector<4x288xf32>, vector<4x288xf32>, vector<4x288xf32>, vector<4x288xf32>, vector<4x288xf32>, vector<4x288xf32>, vector<4x288xf32>, vector<4x288xf32> -> vector<64x288xf32>
    %23 = tpu.concatenate %20, %21 in 0 : vector<4x288xf32>, vector<4x288xf32> -> vector<8x288xf32>
    %24 = tpu.concatenate %22, %23 in 0 : vector<64x288xf32>, vector<8x288xf32> -> vector<72x288xf32>
    %c0_5 = arith.constant 0 : index
    %c0_6 = arith.constant 0 : index
    %25 = vector.load %arg3[%c0_5, %c0_6] : memref<16x72xf32, #tpu.memory_space<vmem>>, vector<16x72xf32>
    %cst = arith.constant dense<0.000000e+00> : vector<16x288xf32>
    %26 = tpu.matmul %25, %24, %cst {dimension_numbers = #tpu.dot_dimension_numbers<[1], [0], [0], [1], [0, 0, 1, 1], [], []>} : vector<16x72xf32>, vector<72x288xf32>, vector<16x288xf32> -> vector<16x288xf32>
    %c0_7 = arith.constant 0 : index
    %c0_8 = arith.constant 0 : index
    %27 = vector.load %arg4[%c0_7, %c0_8] : memref<8x1xf32, #tpu.memory_space<vmem>>, vector<8x1xf32>
    %28 = vector.extract_strided_slice %26 {offsets = [0, 0], sizes = [8, 288], strides = [1, 1]} : vector<16x288xf32> to vector<8x288xf32>
    %29 = vector.broadcast %27 : vector<8x1xf32> to vector<8x288xf32>
    %30 = arith.addf %28, %29 : vector<8x288xf32>
    %c0_9 = arith.constant 0 : index
    %c0_10 = arith.constant 0 : index
    %c0_11 = arith.constant 0 : index
    %c0_12 = arith.constant 0 : index
    %31 = vector.load %arg5[%c0_9, %c0_10, %c0_11, %c0_12] : memref<2x1x8x288xf32, #tpu.memory_space<vmem>>, vector<1x1x8x288xf32>
    %32 = vector.shape_cast %31 : vector<1x1x8x288xf32> to vector<8x288xf32>
    %33 = vector.shape_cast %30 : vector<8x288xf32> to vector<1x1x8x288xf32>
    tpu.vector_store %arg5[%c0_9, %c0_10, %c0_11, %c0_12], %33 {strides = array<i32>} : memref<2x1x8x288xf32, #tpu.memory_space<vmem>>, vector<1x1x8x288xf32>,
    %34 = vector.extract_strided_slice %26 {offsets = [8, 0], sizes = [8, 288], strides = [1, 1]} : vector<16x288xf32> to vector<8x288xf32>
    %35 = vector.broadcast %27 : vector<8x1xf32> to vector<8x288xf32>
    %36 = arith.addf %34, %35 : vector<8x288xf32>
    %c1 = arith.constant 1 : index
    %c0_13 = arith.constant 0 : index
    %c0_14 = arith.constant 0 : index
    %c0_15 = arith.constant 0 : index
    %37 = vector.load %arg5[%c1, %c0_13, %c0_14, %c0_15] : memref<2x1x8x288xf32, #tpu.memory_space<vmem>>, vector<1x1x8x288xf32>
    %38 = vector.shape_cast %37 : vector<1x1x8x288xf32> to vector<8x288xf32>
    %39 = vector.shape_cast %36 : vector<8x288xf32> to vector<1x1x8x288xf32>
    tpu.vector_store %arg5[%c1, %c0_13, %c0_14, %c0_15], %39 {strides = array<i32>} : memref<2x1x8x288xf32, #tpu.memory_space<vmem>>, vector<1x1x8x288xf32>,
    return
  }
  func.func @transform_0(%arg0: i32) -> (i32, i32, i32) {
    %c0_i32 = arith.constant 0 : i32
    %c0_i32_0 = arith.constant 0 : i32
    %c0_i32_1 = arith.constant 0 : i32
    return %arg0, %c0_i32, %c0_i32_0 : i32, i32, i32
  }
  func.func @transform_1(%arg0: i32) -> (i32, i32, i32) {
    %c2_i32 = arith.constant 2 : i32
    %0 = arith.addi %arg0, %c2_i32 : i32
    %c0_i32 = arith.constant 0 : i32
    %c0_i32_0 = arith.constant 0 : i32
    %c0_i32_1 = arith.constant 0 : i32
    return %0, %c0_i32, %c0_i32_0 : i32, i32, i32
  }
  func.func @transform_2(%arg0: i32) -> (i32, i32) {
    %c0_i32 = arith.constant 0 : i32
    %c0_i32_0 = arith.constant 0 : i32
    %c0_i32_1 = arith.constant 0 : i32
    return %c0_i32, %c0_i32_0 : i32, i32
  }
  func.func @transform_3(%arg0: i32) -> (i32, i32) {
    %c0_i32 = arith.constant 0 : i32
    %c0_i32_0 = arith.constant 0 : i32
    %c0_i32_1 = arith.constant 0 : i32
    return %c0_i32, %c0_i32_0 : i32, i32
  }
  func.func @transform_4(%arg0: i32) -> (i32, i32, i32, i32) {
    %c0_i32 = arith.constant 0 : i32
    %c0_i32_0 = arith.constant 0 : i32
    %c0_i32_1 = arith.constant 0 : i32
    %c0_i32_2 = arith.constant 0 : i32
    return %c0_i32, %arg0, %c0_i32_0, %c0_i32_1 : i32, i32, i32, i32
  }
}

</mosaic_0001>

<llo_original>
// kernel: tpu_custom_call.1
$region0: #{tpu_custom_call.1}
  #allocation0 [shape = 'u32[]', space=smem, size = 0x4, offset = 0x4, fixed_abs, tag = 'smem constant byte address 0x4 - core index']
  #allocation1 [shape = 'u32[72,128]{1,0:T(1,128)}', space=vmem, size = 0x9000, scoped, tag = 'internal scratch']
  %s0 = inlined_call_operand.hbm [shape: f32[4,4,342], index: 0, kind: input, shape index: {}]
  %s1 = inlined_call_operand.hbm [shape: f32[4,4,342], index: 1, kind: input, shape index: {}]
  %s2 = inlined_call_operand.hbm [shape: f32[16,72], index: 2, kind: input, shape index: {}]
  %s3 = inlined_call_operand.vmem [shape: f32[8,1], index: 3, kind: input, shape index: {}]
  %s4 = inlined_call_operand.hbm [shape: f32[2,2,8,288], index: 4, kind: output, shape index: {}]
  %s5 = sld [smem:[#allocation0]]
  $region61: #{tpu_custom_call.1} parent=0
    _
  %s7 = ssub.s32 1, %s5
  %s8 = scalar_select 0, %s7, %s5
  $region1: #{tpu_custom_call.1} parent=0
    #allocation2 [shape = 'u8[12288]{0}', space=vmem, size = 0x3000, scoped, tag = 'input window, operand 0']
    #allocation3 [shape = 's32[2]{0}', space=sflag, size = 0x8, scoped, tag = 'scoped memory for tpu_custom_call.1']
    #allocation4 [shape = 's32[2]{0}', space=sflag, size = 0x8, scoped, tag = 'scoped memory for tpu_custom_call.1']
    #allocation5 [shape = 'u8[12288]{0}', space=vmem, size = 0x3000, scoped, tag = 'input window, operand 1']
    #allocation6 [shape = 's32[2]{0}', space=sflag, size = 0x8, scoped, tag = 'scoped memory for tpu_custom_call.1']
    #allocation7 [shape = 'u8[8192]{0}', space=vmem, size = 0x2000, scoped, tag = 'input window, operand 2, single buffered']
    #allocation8 [shape = 'u8[49152]{0}', space=vmem, size = 0xc000, scoped, tag = 'output window, operand 0']
    %9 = vsyncpa [#allocation3], 0
    %s10 = scalar_lea.sflag [#allocation3], 1
    %11 = vsyncpa %s10, 0
    %12 = vsyncpa [#allocation6], 0
    %s13 = scalar_lea.sflag [#allocation6], 1
    %14 = vsyncpa %s13, 0
    %15 = vsyncpa [#allocation4], 0
    %s16 = scalar_lea.sflag [#allocation4], 1
    %17 = vsyncpa %s16, 0
    loop: start=0, step=1, limit=4
    $region2: #{tpu_custom_call.1} parent=1 // loop_pre_header
      _
    $region3: #{tpu_custom_call.1} parent=1 // loop_header
      %s19 = sphi 0, %s23
      %p20 = scmp.ge.s32.totalorder %s19, 4
      %s29 = sphi 0, %s31
      %s32 = sphi 0, %s29
      %s33 = sphi 0, %s32
      %s49 = sphi 0, %s33
      %s57 = sphi 0, %s59
      %s60 = sphi 0, %s57
      %s61 = sphi 0, %s60
      %s77 = sphi 0, %s61
      %s81 = sphi 0, %s81
      %s83 = sphi 0, %s81
      %s84 = sphi 0, %s83
      %s98 = sphi 0, %s84
      %s102 = sphi 0, %s102
      %s104 = sphi 0, %s102
      %s105 = sphi 0, %s104
      %s119 = sphi 0, %s105
      %s125 = sphi 0, %s127
      %s128 = sphi 0, %s125
      %s129 = sphi 0, %s128
      %s145 = sphi 0, %s129
    $region4: #{tpu_custom_call.1} parent=1 // loop_header_branch
      %22 = sbr.rel (%p20) target = $region8
    $region5: #{tpu_custom_call.1} parent=1 // loop_body
      %s24 = ssub.s32 %s19, 1
      %s25 = ssub.s32 %s19, 2
      %s26 = sadd.s32 %s19, 1
      %s27 = ssub.s32 %s19, %s26
      %p28 = scmp.eq.s32.totalorder %s27, 0
      %s30 = sadd.s32 %s29, 1
      %s31 = scalar_select %p28, %s29, %s30
      %p34 = pneg %p28
      %p35 = scmp.eq.s32.totalorder %s19, 1
      %p36 = por %p34, %p35
      %p37 = scmp.ne.s32.totalorder %s29, %s32
      %p38 = scmp.eq.s32.totalorder %s19, 0
      %p39 = por %p37, %p38
      %p40 = scmp.ne.s32.totalorder %s29, %s32
      %p41 = scmp.eq.s32.totalorder %s24, 1
      %p42 = por %p40, %p41
      %p43 = scmp.ne.s32.totalorder %s32, %s33
      %p44 = scmp.eq.s32.totalorder %s24, 0
      %p45 = por %p43, %p44
      %p46 = scmp.ne.s32.totalorder %s32, %s33
      %p47 = scmp.eq.s32.totalorder %s25, 1
      %p48 = por %p46, %p47
      %p50 = scmp.ne.s32.totalorder %s33, %s49
      %p51 = scmp.eq.s32.totalorder %s25, 0
      %p52 = por %p50, %p51
      %s53 = sadd.s32 %s19, 2
      %s54 = sadd.s32 %s26, 2
      %s55 = ssub.s32 %s53, %s54
      %p56 = scmp.eq.s32.totalorder %s55, 0
      %s58 = sadd.s32 %s57, 1
      %s59 = scalar_select %p56, %s57, %s58
      %p62 = pneg %p56
      %p63 = scmp.eq.s32.totalorder %s19, 1
      %p64 = por %p62, %p63
      %p65 = scmp.ne.s32.totalorder %s57, %s60
      %p66 = scmp.eq.s32.totalorder %s19, 0
      %p67 = por %p65, %p66
      %p68 = scmp.ne.s32.totalorder %s57, %s60
      %p69 = scmp.eq.s32.totalorder %s24, 1
      %p70 = por %p68, %p69
      %p71 = scmp.ne.s32.totalorder %s60, %s61
      %p72 = scmp.eq.s32.totalorder %s24, 0
      %p73 = por %p71, %p72
      %p74 = scmp.ne.s32.totalorder %s60, %s61
      %p75 = scmp.eq.s32.totalorder %s25, 1
      %p76 = por %p74, %p75
      %p78 = scmp.ne.s32.totalorder %s61, %s77
      %p79 = scmp.eq.s32.totalorder %s25, 0
      %p80 = por %p78, %p79
      %s82 = sadd.s32 %s81, 1
      %p85 = scmp.eq.s32.totalorder %s19, 1
      %p86 = scmp.ne.s32.totalorder %s81, %s83
      %p87 = scmp.eq.s32.totalorder %s19, 0
      %p88 = por %p86, %p87
      %p89 = scmp.ne.s32.totalorder %s81, %s83
      %p90 = scmp.eq.s32.totalorder %s24, 1
      %p91 = por %p89, %p90
      %p92 = scmp.ne.s32.totalorder %s83, %s84
      %p93 = scmp.eq.s32.totalorder %s24, 0
      %p94 = por %p92, %p93
      %p95 = scmp.ne.s32.totalorder %s83, %s84
      %p96 = scmp.eq.s32.totalorder %s25, 1
      %p97 = por %p95, %p96
      %p99 = scmp.ne.s32.totalorder %s84, %s98
      %p100 = scmp.eq.s32.totalorder %s25, 0
      %p101 = por %p99, %p100
      %s103 = sadd.s32 %s102, 1
      %p106 = scmp.eq.s32.totalorder %s19, 1
      %p107 = scmp.ne.s32.totalorder %s102, %s104
      %p108 = scmp.eq.s32.totalorder %s19, 0
      %p109 = por %p107, %p108
      %p110 = scmp.ne.s32.totalorder %s102, %s104
      %p111 = scmp.eq.s32.totalorder %s24, 1
      %p112 = por %p110, %p111
      %p113 = scmp.ne.s32.totalorder %s104, %s105
      %p114 = scmp.eq.s32.totalorder %s24, 0
      %p115 = por %p113, %p114
      %p116 = scmp.ne.s32.totalorder %s104, %s105
      %p117 = scmp.eq.s32.totalorder %s25, 1
      %p118 = por %p116, %p117
      %p120 = scmp.ne.s32.totalorder %s105, %s119
      %p121 = scmp.eq.s32.totalorder %s25, 0
      %p122 = por %p120, %p121
      %s123 = ssub.s32 %s19, %s26
      %p124 = scmp.eq.s32.totalorder %s123, 0
      %s126 = sadd.s32 %s125, 1
      %s127 = scalar_select %p124, %s125, %s126
      %p130 = pneg %p124
      %p131 = scmp.eq.s32.totalorder %s19, 1
      %p132 = por %p130, %p131
      %p133 = scmp.ne.s32.totalorder %s125, %s128
      %p134 = scmp.eq.s32.totalorder %s19, 0
      %p135 = por %p133, %p134
      %p136 = scmp.ne.s32.totalorder %s125, %s128
      %p137 = scmp.eq.s32.totalorder %s24, 1
      %p138 = por %p136, %p137
      %p139 = scmp.ne.s32.totalorder %s128, %s129
      %p140 = scmp.eq.s32.totalorder %s24, 0
      %p141 = por %p139, %p140
      %p142 = scmp.ne.s32.totalorder %s128, %s129
      %p143 = scmp.eq.s32.totalorder %s25, 1
      %p144 = por %p142, %p143
      %p146 = scmp.ne.s32.totalorder %s129, %s145
      %p147 = scmp.eq.s32.totalorder %s25, 0
      %p148 = por %p146, %p147
      %p149 = scmp.le.s32.totalorder 1, %s19
      %p150 = scmp.lt.s32.totalorder %s19, 3
      %p151 = pnand %p149, %p150
      %p152 = pneg %p151
      // Predicated region
      $region9: #{tpu_custom_call.1} parent=5 // pred_check
        _
      $region10: #{tpu_custom_call.1} parent=5 // pred_check_branch
        %154 = sbr.rel (%p151) target = $region12
      $region11: #{tpu_custom_call.1} parent=5 // pred_region
        %s155 = ssub.s32 %s19, 1
        // Predicated region
        $region13: #{tpu_custom_call.1} parent=11 // pred_check
          %p156 = pneg %p94
        $region14: #{tpu_custom_call.1} parent=11 // pred_check_branch
          %158 = sbr.rel (%p156) target = $region16
        $region15: #{tpu_custom_call.1} parent=11 // pred_region
          %160 = vsyncadd [#allocation6], 0
          %s161 = sshll.u32 %s2, 4
          %s162 = int_to_ptr.hbm [resolvable:$true] %s161
          %s163 = sshll.u32 [#allocation7], 4
          %s164 = int_to_ptr.vmem [resolvable:$true] %s163
          %169 = dma.hbm_to_vmem [thread:$0]  %s162, 256, %s164, [#allocation6], 128, 128, 8
        $region16: #{tpu_custom_call.1} parent=11 // pred_fallthru
          _
        // Predicated region
        $region17: #{tpu_custom_call.1} parent=11 // pred_check
          %p170 = pneg %p115
        $region18: #{tpu_custom_call.1} parent=11 // pred_check_branch
          %172 = sbr.rel (%p170) target = $region20
        $region19: #{tpu_custom_call.1} parent=11 // pred_region
          _
        $region20: #{tpu_custom_call.1} parent=11 // pred_fallthru
          _
      $region12: #{tpu_custom_call.1} parent=5 // pred_fallthru
        _
      %p173 = scmp.lt.s32.totalorder %s19, 2
      // Predicated region
      $region21: #{tpu_custom_call.1} parent=5 // pred_check
        %p174 = pneg %p173
      $region22: #{tpu_custom_call.1} parent=5 // pred_check_branch
        %176 = sbr.rel (%p174) target = $region24
      $region23: #{tpu_custom_call.1} parent=5 // pred_region
        // Predicated region
        $region25: #{tpu_custom_call.1} parent=23 // pred_check
          %p177 = pneg %p39
        $region26: #{tpu_custom_call.1} parent=23 // pred_check_branch
          %179 = sbr.rel (%p177) target = $region28
        $region27: #{tpu_custom_call.1} parent=23 // pred_region
          %s180 = sand.u32 %s29, 1
          %s181 = scalar_lea.sflag [#allocation3], %s180
          %s182 = sand.u32 %s29, 1
          %s183 = smul.addr %s182, 12
          %s184 = scalar_lea.vmem [#allocation2], %s183
          %186 = vsyncadd %s181, 0
          %s187 = smul.addr %s19, 3
          %s188 = smul.addr %s187, 4
          %s189 = scalar_lea.hbm %s0, %s188
          %s191 = sshll.u32 %s189, 4
          %s192 = int_to_ptr.hbm [resolvable:$true] %s191
          %s193 = sshll.u32 %s184, 4
          %s194 = int_to_ptr.vmem [resolvable:$true] %s193
          %196 = dma.hbm_to_vmem [thread:$0]  %s192, 192, %s194, %s181
        $region28: #{tpu_custom_call.1} parent=23 // pred_fallthru
          _
        // Predicated region
        $region29: #{tpu_custom_call.1} parent=23 // pred_check
          %p197 = pneg %p67
        $region30: #{tpu_custom_call.1} parent=23 // pred_check_branch
          %199 = sbr.rel (%p197) target = $region32
        $region31: #{tpu_custom_call.1} parent=23 // pred_region
          %s200 = sand.u32 %s19, 1
          %s201 = scalar_lea.sflag [#allocation6], %s200
          %s202 = sand.u32 %s57, 1
          %s203 = smul.addr %s202, 12
          %s204 = scalar_lea.vmem [#allocation5], %s203
          %s205 = sadd.s32 %s19, 2
          %207 = vsyncadd %s201, 0
          %s208 = smul.addr %s205, 3
          %s209 = smul.addr %s208, 4
          %s210 = scalar_lea.hbm %s1, %s209
          %s212 = sshll.u32 %s210, 4
          %s213 = int_to_ptr.hbm [resolvable:$true] %s212
          %s214 = sshll.u32 %s204, 4
          %s215 = int_to_ptr.vmem [resolvable:$true] %s214
          %217 = dma.hbm_to_vmem [thread:$0]  %s213, 192, %s215, %s201
        $region32: #{tpu_custom_call.1} parent=23 // pred_fallthru
          _
      $region24: #{tpu_custom_call.1} parent=5 // pred_fallthru
        _
      %p218 = scmp.le.s32.totalorder 1, %s19
      %p219 = scmp.lt.s32.totalorder %s19, 3
      %p220 = pnand %p218, %p219
      %p221 = pneg %p220
      // Predicated region
      $region33: #{tpu_custom_call.1} parent=5 // pred_check
        _
      $region34: #{tpu_custom_call.1} parent=5 // pred_check_branch
        %223 = sbr.rel (%p220) target = $region36
      $region35: #{tpu_custom_call.1} parent=5 // pred_region
        %s224 = ssub.s32 %s19, 1
        %s225 = sand.u32 %s32, 1
        %s226 = scalar_lea.sflag [#allocation3], %s225
        %s227 = sand.u32 %s32, 1
        %s228 = smul.addr %s227, 12
        %s229 = scalar_lea.vmem [#allocation2], %s228
        // Predicated region
        $region37: #{tpu_custom_call.1} parent=35 // pred_check
          %p230 = pneg %p45
        $region38: #{tpu_custom_call.1} parent=35 // pred_check_branch
          %232 = sbr.rel (%p230) target = $region40
        $region39: #{tpu_custom_call.1} parent=35 // pred_region
          %234 = dma.done %s226, 192
        $region40: #{tpu_custom_call.1} parent=35 // pred_fallthru
          _
        %s235 = sand.u32 %s24, 1
        %s236 = scalar_lea.sflag [#allocation6], %s235
        %s237 = sand.u32 %s60, 1
        %s238 = smul.addr %s237, 12
        %s239 = scalar_lea.vmem [#allocation5], %s238
        // Predicated region
        $region41: #{tpu_custom_call.1} parent=35 // pred_check
          %p240 = pneg %p73
        $region42: #{tpu_custom_call.1} parent=35 // pred_check_branch
          %242 = sbr.rel (%p240) target = $region44
        $region43: #{tpu_custom_call.1} parent=35 // pred_region
          %244 = dma.done %s236, 192
        $region44: #{tpu_custom_call.1} parent=35 // pred_fallthru
          _
        // Predicated region
        $region45: #{tpu_custom_call.1} parent=35 // pred_check
          %p245 = pneg %p94
        $region46: #{tpu_custom_call.1} parent=35 // pred_check_branch
          %247 = sbr.rel (%p245) target = $region48
        $region47: #{tpu_custom_call.1} parent=35 // pred_region
          %249 = dma.done [#allocation6], 256
        $region48: #{tpu_custom_call.1} parent=35 // pred_fallthru
          _
        %s250 = sand.u32 %s32, 1
        %s251 = scalar_lea.sflag [#allocation3], %s250
        %s252 = sand.u32 %s32, 1
        %s253 = smul.addr %s252, 12
        %s254 = scalar_lea.vmem [#allocation2], %s253
        %p255 = pneg %p45
        %p256 = pneg %p42
        %s257 = sand.u32 %s24, 1
        %s258 = scalar_lea.sflag [#allocation6], %s257
        %s259 = sand.u32 %s60, 1
        %s260 = smul.addr %s259, 12
        %s261 = scalar_lea.vmem [#allocation5], %s260
        %p262 = pneg %p73
        %p263 = pneg %p70
        %p264 = pneg %p94
        %p265 = pneg %p91
        %p266 = pneg %p115
        %p267 = pneg %p112
        %p268 = pneg %p141
        %p269 = pneg %p138
        %s270 = sand.u32 %s128, 1
        %s271 = scalar_lea.sflag [#allocation4], %s270
        %s272 = sand.u32 %s128, 1
        %s273 = smul.addr %s272, 48
        %s274 = scalar_lea.vmem [#allocation8], %s273
        %s275 = sadd.s32 %s24, 2
        %v276 = vld [vmem:[%s229] sm:$0xff]
        %v277 = vld [vmem:[%s229 + $0x8] sm:$0xf]
        %v278 = vld [vmem:[%s239] sm:$0xff]
        %v279 = vld [vmem:[%s239 + $0x8] sm:$0xf]
        %282 = vst [vmem:[#allocation1] ss:$2 sm:$0xff] %v276
        %s283 = scalar_lea.vmem [#allocation1], 16
        %284 = vst [vmem:[%s283] ss:$2 sm:$0xff] %v277
        %v285 = vld.sshfl [vmem:[#allocation1] sm:$0xff pattern:$0x75316420]
        %v286 = vld.sshfl [vmem:[#allocation1 + $0x8] sm:$0xff pattern:$0x75316420]
        %v287 = vld.sshfl [vmem:[#allocation1 + $0x10] sm:$0xff pattern:$0x75316420]
        %s291 = scalar_lea.vmem [#allocation1], 1
        %292 = vst [vmem:[%s291] ss:$2 sm:$0xff] %v276
        %s293 = scalar_lea.vmem [#allocation1], 17
        %294 = vst [vmem:[%s293] ss:$2 sm:$0xff] %v277
        %v295 = vld.sshfl [vmem:[#allocation1] sm:$0xff pattern:$0x75316420]
        %v296 = vld.sshfl [vmem:[#allocation1 + $0x8] sm:$0xff pattern:$0x75316420]
        %v297 = vld.sshfl [vmem:[#allocation1 + $0x10] sm:$0xff pattern:$0x75316420]
        %298 = vrot.lane.b32.xlu0 %v295, 127
        %v299 = vpop.permute.xlu0 %298
        %300 = vrot.lane.b32.xlu0 %v296, 127
        %v301 = vpop.permute.xlu0 %300
        %302 = vrot.lane.b32.xlu0 %v297, 127
        %v303 = vpop.permute.xlu0 %302
        %vm304 = vcmask 1039360
        %v305 = vsel %vm304, %v299, %v301
        %v306 = vsel %vm304, %v301, %v303
        %310 = vst [vmem:[#allocation1] ss:$2 sm:$0xff] %v276
        %s311 = scalar_lea.vmem [#allocation1], 16
        %312 = vst [vmem:[%s311] ss:$2 sm:$0xff] %v277
        %v313 = vld.sshfl [vmem:[#allocation1] sm:$0xff pattern:$0x75316420]
        %v314 = vld.sshfl [vmem:[#allocation1 + $0x8] sm:$0xff pattern:$0x75316420]
        %v315 = vld.sshfl [vmem:[#allocation1 + $0x10] sm:$0xff pattern:$0x75316420]
        %316 = vrot.lane.b32.xlu0 %v313, 126
        %v317 = vpop.permute.xlu0 %316
        %318 = vrot.lane.b32.xlu0 %v314, 126
        %v319 = vpop.permute.xlu0 %318
        %320 = vrot.lane.b32.xlu0 %v315, 126
        %v321 = vpop.permute.xlu0 %320
        %vm322 = vcmask 1031168
        %v323 = vsel %vm322, %v317, %v319
        %v324 = vsel %vm322, %v319, %v321
        %s328 = scalar_lea.vmem [#allocation1], 1
        %329 = vst [vmem:[%s328] ss:$2 sm:$0xff] %v276
        %s330 = scalar_lea.vmem [#allocation1], 17
        %331 = vst [vmem:[%s330] ss:$2 sm:$0xff] %v277
        %v332 = vld.sshfl [vmem:[#allocation1] sm:$0xff pattern:$0x75316420]
        %v333 = vld.sshfl [vmem:[#allocation1 + $0x8] sm:$0xff pattern:$0x75316420]
        %v334 = vld.sshfl [vmem:[#allocation1 + $0x10] sm:$0xff pattern:$0x75316420]
        %335 = vrot.lane.b32.xlu0 %v332, 110
        %v336 = vpop.permute.xlu0 %335
        %337 = vrot.lane.b32.xlu0 %v333, 110
        %v338 = vpop.permute.xlu0 %337
        %339 = vrot.lane.b32.xlu0 %v334, 110
        %v340 = vpop.permute.xlu0 %339
        %vm341 = vcmask 900096
        %v342 = vsel %vm341, %v336, %v338
        %v343 = vsel %vm341, %v338, %v340
        %347 = vst [vmem:[#allocation1] ss:$2 sm:$0xff] %v276
        %s348 = scalar_lea.vmem [#allocation1], 16
        %349 = vst [vmem:[%s348] ss:$2 sm:$0xff] %v277
        %v350 = vld.sshfl [vmem:[#allocation1] sm:$0xff pattern:$0x75316420]
        %v351 = vld.sshfl [vmem:[#allocation1 + $0x8] sm:$0xff pattern:$0x75316420]
        %v352 = vld.sshfl [vmem:[#allocation1 + $0x10] sm:$0xff pattern:$0x75316420]
        %353 = vrot.lane.b32.xlu0 %v350, 109
        %v354 = vpop.permute.xlu0 %353
        %355 = vrot.lane.b32.xlu0 %v351, 109
        %v356 = vpop.permute.xlu0 %355
        %357 = vrot.lane.b32.xlu0 %v352, 109
        %v358 = vpop.permute.xlu0 %357
        %vm359 = vcmask 891904
        %v360 = vsel %vm359, %v354, %v356
        %v361 = vsel %vm359, %v356, %v358
        %s365 = scalar_lea.vmem [#allocation1], 1
        %366 = vst [vmem:[%s365] ss:$2 sm:$0xff] %v276
        %s367 = scalar_lea.vmem [#allocation1], 17
        %368 = vst [vmem:[%s367] ss:$2 sm:$0xff] %v277
        %v369 = vld.sshfl [vmem:[#allocation1] sm:$0xff pattern:$0x75316420]
        %v370 = vld.sshfl [vmem:[#allocation1 + $0x8] sm:$0xff pattern:$0x75316420]
        %v371 = vld.sshfl [vmem:[#allocation1 + $0x10] sm:$0xff pattern:$0x75316420]
        %372 = vrot.lane.b32.xlu0 %v369, 108
        %v373 = vpop.permute.xlu0 %372
        %374 = vrot.lane.b32.xlu0 %v370, 108
        %v375 = vpop.permute.xlu0 %374
        %376 = vrot.lane.b32.xlu0 %v371, 108
        %v377 = vpop.permute.xlu0 %376
        %vm378 = vcmask 883712
        %v379 = vsel %vm378, %v373, %v375
        %v380 = vsel %vm378, %v375, %v377
        %384 = vst [vmem:[#allocation1] ss:$2 sm:$0xff] %v276
        %s385 = scalar_lea.vmem [#allocation1], 16
        %386 = vst [vmem:[%s385] ss:$2 sm:$0xff] %v277
        %v387 = vld.sshfl [vmem:[#allocation1] sm:$0xff pattern:$0x75316420]
        %v388 = vld.sshfl [vmem:[#allocation1 + $0x8] sm:$0xff pattern:$0x75316420]
        %v389 = vld.sshfl [vmem:[#allocation1 + $0x10] sm:$0xff pattern:$0x75316420]
        %390 = vrot.lane.b32.xlu0 %v387, 92
        %v391 = vpop.permute.xlu0 %390
        %392 = vrot.lane.b32.xlu0 %v388, 92
        %v393 = vpop.permute.xlu0 %392
        %394 = vrot.lane.b32.xlu0 %v389, 92
        %v395 = vpop.permute.xlu0 %394
        %vm396 = vcmask 752640
        %v397 = vsel %vm396, %v391, %v393
        %v398 = vsel %vm396, %v393, %v395
        %s402 = scalar_lea.vmem [#allocation1], 1
        %403 = vst [vmem:[%s402] ss:$2 sm:$0xff] %v276
        %s404 = scalar_lea.vmem [#allocation1], 17
        %405 = vst [vmem:[%s404] ss:$2 sm:$0xff] %v277
        %v406 = vld.sshfl [vmem:[#allocation1] sm:$0xff pattern:$0x75316420]
        %v407 = vld.sshfl [vmem:[#allocation1 + $0x8] sm:$0xff pattern:$0x75316420]
        %v408 = vld.sshfl [vmem:[#allocation1 + $0x10] sm:$0xff pattern:$0x75316420]
        %409 = vrot.lane.b32.xlu0 %v406, 91
        %v410 = vpop.permute.xlu0 %409
        %411 = vrot.lane.b32.xlu0 %v407, 91
        %v412 = vpop.permute.xlu0 %411
        %413 = vrot.lane.b32.xlu0 %v408, 91
        %v414 = vpop.permute.xlu0 %413
        %vm415 = vcmask 744448
        %v416 = vsel %vm415, %v410, %v412
        %v417 = vsel %vm415, %v412, %v414
        %421 = vst [vmem:[#allocation1] ss:$2 sm:$0xff] %v276
        %s422 = scalar_lea.vmem [#allocation1], 16
        %423 = vst [vmem:[%s422] ss:$2 sm:$0xff] %v277
        %v424 = vld.sshfl [vmem:[#allocation1] sm:$0xff pattern:$0x75316420]
        %v425 = vld.sshfl [vmem:[#allocation1 + $0x8] sm:$0xff pattern:$0x75316420]
        %v426 = vld.sshfl [vmem:[#allocation1 + $0x10] sm:$0xff pattern:$0x75316420]
        %427 = vrot.lane.b32.xlu0 %v424, 90
        %v428 = vpop.permute.xlu0 %427
        %429 = vrot.lane.b32.xlu0 %v425, 90
        %v430 = vpop.permute.xlu0 %429
        %431 = vrot.lane.b32.xlu0 %v426, 90
        %v432 = vpop.permute.xlu0 %431
        %vm433 = vcmask 736256
        %v434 = vsel %vm433, %v428, %v430
        %v435 = vsel %vm433, %v430, %v432
        %s441 = scalar_lea.vmem [#allocation1], 1
        %442 = vst [vmem:[%s441] ss:$2 sm:$0xff] %v278
        %s443 = scalar_lea.vmem [#allocation1], 17
        %444 = vst [vmem:[%s443] ss:$2 sm:$0xff] %v279
        %v445 = vld.sshfl [vmem:[#allocation1] sm:$0xff pattern:$0x75316420]
        %v446 = vld.sshfl [vmem:[#allocation1 + $0x8] sm:$0xff pattern:$0x75316420]
        %v447 = vld.sshfl [vmem:[#allocation1 + $0x10] sm:$0xff pattern:$0x75316420]
        %451 = vst [vmem:[#allocation1] ss:$2 sm:$0xff] %v278
        %s452 = scalar_lea.vmem [#allocation1], 16
        %453 = vst [vmem:[%s452] ss:$2 sm:$0xff] %v279
        %v454 = vld.sshfl [vmem:[#allocation1] sm:$0xff pattern:$0x75316420]
        %v455 = vld.sshfl [vmem:[#allocation1 + $0x8] sm:$0xff pattern:$0x75316420]
        %v456 = vld.sshfl [vmem:[#allocation1 + $0x10] sm:$0xff pattern:$0x75316420]
        %457 = vrot.lane.b32.xlu0 %v454, 127
        %v458 = vpop.permute.xlu0 %457
        %459 = vrot.lane.b32.xlu0 %v455, 127
        %v460 = vpop.permute.xlu0 %459
        %461 = vrot.lane.b32.xlu0 %v456, 127
        %v462 = vpop.permute.xlu0 %461
        %v463 = vsel %vm304, %v458, %v460
        %v464 = vsel %vm304, %v460, %v462
        %s468 = scalar_lea.vmem [#allocation1], 1
        %469 = vst [vmem:[%s468] ss:$2 sm:$0xff] %v278
        %s470 = scalar_lea.vmem [#allocation1], 17
        %471 = vst [vmem:[%s470] ss:$2 sm:$0xff] %v279
        %v472 = vld.sshfl [vmem:[#allocation1] sm:$0xff pattern:$0x75316420]
        %v473 = vld.sshfl [vmem:[#allocation1 + $0x8] sm:$0xff pattern:$0x75316420]
        %v474 = vld.sshfl [vmem:[#allocation1 + $0x10] sm:$0xff pattern:$0x75316420]
        %475 = vrot.lane.b32.xlu0 %v472, 126
        %v476 = vpop.permute.xlu0 %475
        %477 = vrot.lane.b32.xlu0 %v473, 126
        %v478 = vpop.permute.xlu0 %477
        %479 = vrot.lane.b32.xlu0 %v474, 126
        %v480 = vpop.permute.xlu0 %479
        %v481 = vsel %vm322, %v476, %v478
        %v482 = vsel %vm322, %v478, %v480
        %486 = vst [vmem:[#allocation1] ss:$2 sm:$0xff] %v278
        %s487 = scalar_lea.vmem [#allocation1], 16
        %488 = vst [vmem:[%s487] ss:$2 sm:$0xff] %v279
        %v489 = vld.sshfl [vmem:[#allocation1] sm:$0xff pattern:$0x75316420]
        %v490 = vld.sshfl [vmem:[#allocation1 + $0x8] sm:$0xff pattern:$0x75316420]
        %v491 = vld.sshfl [vmem:[#allocation1 + $0x10] sm:$0xff pattern:$0x75316420]
        %492 = vrot.lane.b32.xlu0 %v489, 110
        %v493 = vpop.permute.xlu0 %492
        %494 = vrot.lane.b32.xlu0 %v490, 110
        %v495 = vpop.permute.xlu0 %494
        %496 = vrot.lane.b32.xlu0 %v491, 110
        %v497 = vpop.permute.xlu0 %496
        %v498 = vsel %vm341, %v493, %v495
        %v499 = vsel %vm341, %v495, %v497
        %s503 = scalar_lea.vmem [#allocation1], 1
        %504 = vst [vmem:[%s503] ss:$2 sm:$0xff] %v278
        %s505 = scalar_lea.vmem [#allocation1], 17
        %506 = vst [vmem:[%s505] ss:$2 sm:$0xff] %v279
        %v507 = vld.sshfl [vmem:[#allocation1] sm:$0xff pattern:$0x75316420]
        %v508 = vld.sshfl [vmem:[#allocation1 + $0x8] sm:$0xff pattern:$0x75316420]
        %v509 = vld.sshfl [vmem:[#allocation1 + $0x10] sm:$0xff pattern:$0x75316420]
        %510 = vrot.lane.b32.xlu0 %v507, 109
        %v511 = vpop.permute.xlu0 %510
        %512 = vrot.lane.b32.xlu0 %v508, 109
        %v513 = vpop.permute.xlu0 %512
        %514 = vrot.lane.b32.xlu0 %v509, 109
        %v515 = vpop.permute.xlu0 %514
        %v516 = vsel %vm359, %v511, %v513
        %v517 = vsel %vm359, %v513, %v515
        %521 = vst [vmem:[#allocation1] ss:$2 sm:$0xff] %v278
        %s522 = scalar_lea.vmem [#allocation1], 16
        %523 = vst [vmem:[%s522] ss:$2 sm:$0xff] %v279
        %v524 = vld.sshfl [vmem:[#allocation1] sm:$0xff pattern:$0x75316420]
        %v525 = vld.sshfl [vmem:[#allocation1 + $0x8] sm:$0xff pattern:$0x75316420]
        %v526 = vld.sshfl [vmem:[#allocation1 + $0x10] sm:$0xff pattern:$0x75316420]
        %527 = vrot.lane.b32.xlu0 %v524, 108
        %v528 = vpop.permute.xlu0 %527
        %529 = vrot.lane.b32.xlu0 %v525, 108
        %v530 = vpop.permute.xlu0 %529
        %531 = vrot.lane.b32.xlu0 %v526, 108
        %v532 = vpop.permute.xlu0 %531
        %v533 = vsel %vm378, %v528, %v530
        %v534 = vsel %vm378, %v530, %v532
        %s538 = scalar_lea.vmem [#allocation1], 1
        %539 = vst [vmem:[%s538] ss:$2 sm:$0xff] %v278
        %s540 = scalar_lea.vmem [#allocation1], 17
        %541 = vst [vmem:[%s540] ss:$2 sm:$0xff] %v279
        %v542 = vld.sshfl [vmem:[#allocation1] sm:$0xff pattern:$0x75316420]
        %v543 = vld.sshfl [vmem:[#allocation1 + $0x8] sm:$0xff pattern:$0x75316420]
        %v544 = vld.sshfl [vmem:[#allocation1 + $0x10] sm:$0xff pattern:$0x75316420]
        %545 = vrot.lane.b32.xlu0 %v542, 92
        %v546 = vpop.permute.xlu0 %545
        %547 = vrot.lane.b32.xlu0 %v543, 92
        %v548 = vpop.permute.xlu0 %547
        %549 = vrot.lane.b32.xlu0 %v544, 92
        %v550 = vpop.permute.xlu0 %549
        %v551 = vsel %vm396, %v546, %v548
        %v552 = vsel %vm396, %v548, %v550
        %vm556 = vcmask 1043456
        %v557 = vsel %vm556, %v285, %v305
        %v558 = vsel %vm556, %v286, %v306
        %v559 = vsel %vm556, %v287, %v303
        %v560 = vsel %vm556, %v323, %v342
        %v561 = vsel %vm556, %v324, %v343
        %v562 = vsel %vm556, %v321, %v340
        %v563 = vsel %vm556, %v360, %v379
        %v564 = vsel %vm556, %v361, %v380
        %v565 = vsel %vm556, %v358, %v377
        %v566 = vsel %vm556, %v397, %v416
        %v567 = vsel %vm556, %v398, %v417
        %v568 = vsel %vm556, %v395, %v414
        %v569 = vsel %vm556, %v434, %v445
        %v570 = vsel %vm556, %v435, %v446
        %v571 = vsel %vm556, %v432, %v447
        %v572 = vsel %vm556, %v463, %v481
        %v573 = vsel %vm556, %v464, %v482
        %v574 = vsel %vm556, %v462, %v480
        %v575 = vsel %vm556, %v498, %v516
        %v576 = vsel %vm556, %v499, %v517
        %v577 = vsel %vm556, %v497, %v515
        %v578 = vsel %vm556, %v533, %v551
        %v579 = vsel %vm556, %v534, %v552
        %v580 = vsel %vm556, %v532, %v550
        %581 = vst [vmem:[#allocation1] ss:$2 sm:$0xff] %v278
        %s582 = scalar_lea.vmem [#allocation1], 16
        %583 = vst [vmem:[%s582] ss:$2 sm:$0xff] %v279
        %v584 = vld.sshfl [vmem:[#allocation1] sm:$0xff pattern:$0x75316420]
        %v585 = vld.sshfl [vmem:[#allocation1 + $0x8] sm:$0xff pattern:$0x75316420]
        %v586 = vld.sshfl [vmem:[#allocation1 + $0x10] sm:$0xff pattern:$0x75316420]
        %s590 = scalar_lea.vmem [#allocation1], 1
        %591 = vst [vmem:[%s590] ss:$2 sm:$0xff] %v278
        %s592 = scalar_lea.vmem [#allocation1], 17
        %593 = vst [vmem:[%s592] ss:$2 sm:$0xff] %v279
        %v594 = vld.sshfl [vmem:[#allocation1] sm:$0xff pattern:$0x75316420]
        %v595 = vld.sshfl [vmem:[#allocation1 + $0x8] sm:$0xff pattern:$0x75316420]
        %v596 = vld.sshfl [vmem:[#allocation1 + $0x10] sm:$0xff pattern:$0x75316420]
        %597 = vrot.lane.b32.xlu0 %v594, 127
        %v598 = vpop.permute.xlu0 %597
        %599 = vrot.lane.b32.xlu0 %v595, 127
        %v600 = vpop.permute.xlu0 %599
        %601 = vrot.lane.b32.xlu0 %v596, 127
        %v602 = vpop.permute.xlu0 %601
        %v603 = vsel %vm304, %v598, %v600
        %v604 = vsel %vm304, %v600, %v602
        %v608 = vsel %vm556, %v584, %v603
        %v609 = vsel %vm556, %v585, %v604
        %v610 = vsel %vm556, %v586, %v602
        %614 = vrot.lane.b32.xlu0 %v608, 91
        %v615 = vpop.permute.xlu0 %614
        %616 = vrot.lane.b32.xlu0 %v609, 91
        %v617 = vpop.permute.xlu0 %616
        %618 = vrot.lane.b32.xlu0 %v610, 91
        %v619 = vpop.permute.xlu0 %618
        %v620 = vsel %vm415, %v615, %v617
        %v621 = vsel %vm415, %v617, %v619
        %v625 = vld [vmem:[#allocation7] sm:$0xff]
        %v626 = vld [vmem:[#allocation7 + $0x8] sm:$0xff]
        %vm627 = vcmask 588800
        %v629 = vsel %vm627, %v625, 0
        %v632 = vsel %vm627, %v626, 0
        %634 = vmatpush.msra.mxu0 0.0
        %635 = vmatpush.msra.mxu0 0.0
        %636 = vmatpush.msra.mxu0 0.0
        %637 = vmatpush.msra.mxu0 0.0
        %638 = vmatpush.msra.mxu0 0.0
        %639 = vmatpush.msra.mxu0 0.0
        %640 = vmatpush.msra.mxu0 0.0
        %641 = vmatpush.msra.mxu0 %v620
        %642 = vmatpush.msra.mxu0 %v578
        %643 = vmatpush.msra.mxu0 %v575
        %644 = vmatpush.msra.mxu0 %v572
        %645 = vmatpush.msra.mxu0 %v569
        %646 = vmatpush.msra.mxu0 %v566
        %647 = vmatpush.msra.mxu0 %v563
        %648 = vmatpush.msra.mxu0 %v560
        %649 = vmatpush.msra.mxu0 %v557
        %650 = vmatmul.f32.gmra.mxu0 %v629
        %v651 = vpop.f32.mrf.mxu0
        %v652 = vadd.f32 0.0, %v651
        %653 = vmatmul.f32.gmra.mxu0 %v632
        %v654 = vpop.f32.mrf.mxu0
        %v655 = vadd.f32 0.0, %v654
        %656 = vdwg.mxu0
        %657 = vmatpush.msra.mxu0 0.0
        %658 = vmatpush.msra.mxu0 0.0
        %659 = vmatpush.msra.mxu0 0.0
        %660 = vmatpush.msra.mxu0 0.0
        %661 = vmatpush.msra.mxu0 0.0
        %662 = vmatpush.msra.mxu0 0.0
        %663 = vmatpush.msra.mxu0 0.0
        %664 = vmatpush.msra.mxu0 %v621
        %665 = vmatpush.msra.mxu0 %v579
        %666 = vmatpush.msra.mxu0 %v576
        %667 = vmatpush.msra.mxu0 %v573
        %668 = vmatpush.msra.mxu0 %v570
        %669 = vmatpush.msra.mxu0 %v567
        %670 = vmatpush.msra.mxu0 %v564
        %671 = vmatpush.msra.mxu0 %v561
        %672 = vmatpush.msra.mxu0 %v558
        %673 = vmatmul.f32.gmra.mxu0 %v629
        %v674 = vpop.f32.mrf.mxu0
        %v675 = vadd.f32 0.0, %v674
        %676 = vmatmul.f32.gmra.mxu0 %v632
        %v677 = vpop.f32.mrf.mxu0
        %v678 = vadd.f32 0.0, %v677
        %679 = vdwg.mxu0
        %680 = vmatpush.msra.mxu0 0.0
        %681 = vmatpush.msra.mxu0 0.0
        %682 = vmatpush.msra.mxu0 0.0
        %683 = vmatpush.msra.mxu0 0.0
        %684 = vmatpush.msra.mxu0 0.0
        %685 = vmatpush.msra.mxu0 0.0
        %686 = vmatpush.msra.mxu0 0.0
        %687 = vmatpush.msra.mxu0 %v619
        %688 = vmatpush.msra.mxu0 %v580
        %689 = vmatpush.msra.mxu0 %v577
        %690 = vmatpush.msra.mxu0 %v574
        %691 = vmatpush.msra.mxu0 %v571
        %692 = vmatpush.msra.mxu0 %v568
        %693 = vmatpush.msra.mxu0 %v565
        %694 = vmatpush.msra.mxu0 %v562
        %695 = vmatpush.msra.mxu0 %v559
        %696 = vmatmul.f32.gmra.mxu0 %v629
        %v697 = vpop.f32.mrf.mxu0
        %v698 = vadd.f32 0.0, %v697
        %699 = vmatmul.f32.gmra.mxu0 %v632
        %v700 = vpop.f32.mrf.mxu0
        %v701 = vadd.f32 0.0, %v700
        %702 = vdwg.mxu0
        %v703 = vld [vmem:[%s3] sm:$0xff]
        %705 = vset.pattern.permute.xlu0 0
        %706 = vperm.xlu0 %705, %v703
        %v707 = vpop.permute.xlu0 %706
        %v709 = vadd.f32 %v652, %v707
        %v710 = vadd.f32 %v675, %v707
        %v711 = vadd.f32 %v698, %v707
        %712 = vst [vmem:[%s274] sm:$0xff] %v709
        %713 = vst [vmem:[%s274 + $0x8] sm:$0xff] %v710
        %vm714 = vcmask 261120
        %715 = vst.msk [vmem:[%s274 + $0x10] sm:$0xff] %vm714, %v711
        %v716 = vadd.f32 %v655, %v707
        %v717 = vadd.f32 %v678, %v707
        %v718 = vadd.f32 %v701, %v707
        %s719 = scalar_lea.vmem %s274, 24 [#allocation8]
        %720 = vst [vmem:[%s719] sm:$0xff] %v716
        %721 = vst [vmem:[%s719 + $0x8] sm:$0xff] %v717
        %722 = vst.msk [vmem:[%s719 + $0x10] sm:$0xff] %vm714, %v718
        %s723 = sand.u32 %s128, 1
        %s724 = scalar_lea.sflag [#allocation4], %s723
        %s725 = sand.u32 %s128, 1
        %s726 = smul.addr %s725, 48
        %s727 = scalar_lea.vmem [#allocation8], %s726
        // Predicated region
        $region49: #{tpu_custom_call.1} parent=35 // pred_check
          %p728 = pneg %p138
        $region50: #{tpu_custom_call.1} parent=35 // pred_check_branch
          %730 = sbr.rel (%p728) target = $region52
        $region51: #{tpu_custom_call.1} parent=35 // pred_region
          %732 = vsyncadd %s724, 0
          %s733 = smul.addr %s24, 3
          %s734 = smul.addr %s733, 8
          %s735 = scalar_lea.hbm %s4, %s734
          %s736 = sshll.u32 %s727, 4
          %s737 = int_to_ptr.vmem [resolvable:$true] %s736
          %s738 = sshll.u32 %s735, 4
          %s739 = int_to_ptr.hbm [resolvable:$true] %s738
          %744 = dma.vmem_to_hbm [thread:$0]  %s737, 768, %s739, %s724, 384, 768, 24
        $region52: #{tpu_custom_call.1} parent=35 // pred_fallthru
          _
      $region36: #{tpu_custom_call.1} parent=5 // pred_fallthru
        _
      %p745 = scmp.le.s32.totalorder 2, %s19
      // Predicated region
      $region53: #{tpu_custom_call.1} parent=5 // pred_check
        %p746 = pneg %p745
      $region54: #{tpu_custom_call.1} parent=5 // pred_check_branch
        %748 = sbr.rel (%p746) target = $region56
      $region55: #{tpu_custom_call.1} parent=5 // pred_region
        %s749 = ssub.s32 %s19, 2
        // Predicated region
        $region57: #{tpu_custom_call.1} parent=55 // pred_check
          %p750 = pneg %p144
        $region58: #{tpu_custom_call.1} parent=55 // pred_check_branch
          %752 = sbr.rel (%p750) target = $region60
        $region59: #{tpu_custom_call.1} parent=55 // pred_region
          %s753 = sand.u32 %s129, 1
          %s754 = scalar_lea.sflag [#allocation4], %s753
          %s755 = sand.u32 %s129, 1
          %s756 = smul.addr %s755, 48
          %s757 = scalar_lea.vmem [#allocation8], %s756
          %759 = dma.done %s754, 768
        $region60: #{tpu_custom_call.1} parent=55 // pred_fallthru
          _
      $region56: #{tpu_custom_call.1} parent=5 // pred_fallthru
        _
    $region6: #{tpu_custom_call.1} parent=1 // loop_footer
      %s23 = sadd.s32 1, %s19
    $region7: #{tpu_custom_call.1} parent=1 // loop_footer_branch
      %18 = sbr.rel target = $region3
    $region8: #{tpu_custom_call.1} parent=1 // loop_exit
      _
    %760 = vsyncpa [#allocation3], 1
    %s761 = scalar_lea.sflag [#allocation3], 1
    %762 = vsyncpa %s761, 1
    %763 = vsyncpa [#allocation6], 1
    %s764 = scalar_lea.sflag [#allocation6], 1
    %765 = vsyncpa %s764, 1
    %766 = vsyncpa [#allocation4], 1
    %s767 = scalar_lea.sflag [#allocation4], 1
    %768 = vsyncpa %s767, 1

</llo_original>
